<compile_context>
chip_gen: v6e
topology: v6e:2x2x1
jax: 0.10.0
libtpu: 0.0.40
codegen_flags: <defaults>
</compile_context>

<pallas_src>
import math

import jax
import jax.numpy as jnp
from jax.experimental import pallas as pl
from jax.experimental.pallas import tpu as pltpu


# ---------------------------------------------------------------------------
# tile-size helper
# ---------------------------------------------------------------------------
def _pick_tile(size, target, align):
    """Largest tile <= target that divides `size` and is `align`-aligned.

    If size <= target (or no aligned divisor exists) the full dimension is
    used, which always satisfies the (8, 128) tiling constraint."""
    if size <= target:
        return size
    t = (target // align) * align
    while t >= align:
        if size % t == 0:
            return t
        t -= align
    return size


# ---------------------------------------------------------------------------
# Kernel 1: fused gate/up projection + SwiGLU epilogue
#   h = silu(x @ W1^T) * (x @ W3^T)
# ---------------------------------------------------------------------------
def _gate_up_silu_kernel(x_ref, w1_ref, w3_ref, h_ref, acc1_ref, acc3_ref):
    k = pl.program_id(2)

    @pl.when(k == 0)
    def _init():
        acc1_ref[...] = jnp.zeros_like(acc1_ref)
        acc3_ref[...] = jnp.zeros_like(acc3_ref)

    x = x_ref[...]  # (tm, tk) bf16 -- loaded once, feeds BOTH dots (x read 1x)
    acc1_ref[...] += jnp.dot(x, w1_ref[...], preferred_element_type=jnp.float32)
    acc3_ref[...] += jnp.dot(x, w3_ref[...], preferred_element_type=jnp.float32)

    @pl.when(k == pl.num_programs(2) - 1)
    def _finalize():
        gate = acc1_ref[...]                      # f32
        up = acc3_ref[...]                        # f32
        sig = 1.0 / (1.0 + jnp.exp(-gate))        # SiLU in f32 (EUP exp)
        h_ref[...] = (gate * sig * up).astype(h_ref.dtype)


def gate_up_silu(x2d, w1_t, w3_t, *, out_dtype=jnp.bfloat16,
                 tm_target=256, tn_target=256, tk_target=512):
    """x2d: [M, K] bf16; w1_t/w3_t: [K, H] bf16 (transposed weights)."""
    M, K = x2d.shape
    K1, H = w1_t.shape
    K3, H3 = w3_t.shape
    assert K == K1 == K3 and H == H3
    tm = _pick_tile(M, tm_target, 8)
    tn = _pick_tile(H, tn_target, 128)
    tk = _pick_tile(K, tk_target, 128)
    grid = (M // tm, H // tn, K // tk)
    return pl.pallas_call(
        _gate_up_silu_kernel,
        out_shape=jax.ShapeDtypeStruct((M, H), out_dtype),
        grid_spec=pltpu.PrefetchScalarGridSpec(
            num_scalar_prefetch=0,
            grid=grid,
            in_specs=[
                pl.BlockSpec((tm, tk), lambda i, j, k: (i, k)),
                pl.BlockSpec((tk, tn), lambda i, j, k: (k, j)),
                pl.BlockSpec((tk, tn), lambda i, j, k: (k, j)),
            ],
            out_specs=pl.BlockSpec((tm, tn), lambda i, j, k: (i, j)),
            scratch_shapes=[
                pltpu.VMEM((tm, tn), jnp.float32),
                pltpu.VMEM((tm, tn), jnp.float32),
            ],
        ),
        compiler_params=pltpu.CompilerParams(
            dimension_semantics=("parallel", "parallel", "arbitrary")
        ),
    )(x2d, w1_t, w3_t)


# ---------------------------------------------------------------------------
# Kernel 2: tiled matmul with f32 accumulator (w2 projection)
# ---------------------------------------------------------------------------
def _matmul_kernel(a_ref, b_ref, o_ref, acc_ref):
    k = pl.program_id(2)

    @pl.when(k == 0)
    def _init():
        acc_ref[...] = jnp.zeros_like(acc_ref)

    acc_ref[...] += jnp.dot(a_ref[...], b_ref[...],
                            preferred_element_type=jnp.float32)

    @pl.when(k == pl.num_programs(2) - 1)
    def _finalize():
        o_ref[...] = acc_ref[...].astype(o_ref.dtype)


def matmul(a, b, *, out_dtype, tm_target=256, tn_target=256, tk_target=512):
    """a: [M, K], b: [K, N] (transposed weight). Returns [M, N] in out_dtype."""
    M, K = a.shape
    K2, N = b.shape
    assert K == K2
    tm = _pick_tile(M, tm_target, 8)
    tn = _pick_tile(N, tn_target, 128)
    tk = _pick_tile(K, tk_target, 128)
    grid = (M // tm, N // tn, K // tk)
    return pl.pallas_call(
        _matmul_kernel,
        out_shape=jax.ShapeDtypeStruct((M, N), out_dtype),
        grid_spec=pltpu.PrefetchScalarGridSpec(
            num_scalar_prefetch=0,
            grid=grid,
            in_specs=[
                pl.BlockSpec((tm, tk), lambda i, j, k: (i, k)),
                pl.BlockSpec((tk, tn), lambda i, j, k: (k, j)),
            ],
            out_specs=pl.BlockSpec((tm, tn), lambda i, j, k: (i, j)),
            scratch_shapes=[pltpu.VMEM((tm, tn), jnp.float32)],
        ),
        compiler_params=pltpu.CompilerParams(
            dimension_semantics=("parallel", "parallel", "arbitrary")
        ),
    )(a, b)


# ---------------------------------------------------------------------------
# FeedForward module (JAX/Pallas), mirroring llama FeedForward.forward
# ---------------------------------------------------------------------------
class FeedForwardPallas:
    def __init__(self, dim, hidden_dim, multiple_of, ffn_dim_multiplier, key,
                 param_dtype=jnp.bfloat16):
        # same hidden_dim derivation as the PyTorch module
        hidden_dim = int(2 * hidden_dim / 3)
        if ffn_dim_multiplier is not None:
            hidden_dim = int(ffn_dim_multiplier * hidden_dim)
        hidden_dim = multiple_of * ((hidden_dim + multiple_of - 1) // multiple_of)

        self.dim = dim
        self.hidden_dim = hidden_dim

        k1, k2, k3 = jax.random.split(key, 3)
        init = lambda k, shp: (0.02 * jax.random.normal(k, shp, jnp.float32)
                               ).astype(param_dtype)
        # stored transposed ([in, out]) so y = x @ Wt; bf16 halves weight HBM traffic
        self.w1_t = init(k1, (dim, hidden_dim))
        self.w3_t = init(k3, (dim, hidden_dim))
        self.w2_t = init(k2, (hidden_dim, dim))

    def forward(self, x):
        B, S, D = x.shape
        assert D == self.dim
        out_dtype = x.dtype
        x2d = x.reshape(B * S, D).astype(jnp.bfloat16)        # bf16 MXU inputs
        h = gate_up_silu(x2d, self.w1_t, self.w3_t,
                         out_dtype=jnp.bfloat16)               # [M, H] bf16
        y = matmul(h, self.w2_t, out_dtype=out_dtype)          # [M, D] f32 out
        return y.reshape(B, S, D)


# ---------------------------------------------------------------------------
# Pure-JAX reference (mirrors the PyTorch math, bf16 inputs / f32 accumulation)
# ---------------------------------------------------------------------------
def reference_forward(mod, x):
    B, S, D = x.shape
    xb = x.reshape(B * S, D).astype(jnp.bfloat16).astype(jnp.float32)
    w1 = mod.w1_t.astype(jnp.float32)
    w3 = mod.w3_t.astype(jnp.float32)
    w2 = mod.w2_t.astype(jnp.float32)
    gate = xb @ w1
    up = xb @ w3
    h = gate * jax.nn.sigmoid(gate) * up
    h = h.astype(jnp.bfloat16).astype(jnp.float32)
    y = h @ w2
    return y.reshape(B, S, D).astype(x.dtype)


if __name__ == "__main__":
    # Small-but-tileable synthetic config
    B, S = 2, 8
    dim = 256
    hidden_dim_arg = 1024          # -> int(2*1024/3)=682 -> rounded to 768
    multiple_of = 128
    ffn_dim_multiplier = None

    root = jax.random.PRNGKey(0)
    kx, kw = jax.random.split(root)
    x = jax.random.normal(kx, (B, S, dim), jnp.float32)

    mod = FeedForwardPallas(dim, hidden_dim_arg, multiple_of,
                            ffn_dim_multiplier, kw)

    out = mod.forward(x)
    out = jax.block_until_ready(out)

    ref = reference_forward(mod, x)
    assert out.shape == (B, S, dim)
    assert jnp.allclose(out, ref, rtol=1e-2, atol=1e-2), "mismatch vs reference"

    print("KERNEL_OK")
</pallas_src>

<mosaic_0001>
module attributes {stable_mosaic.version = 11 : i64} {
  func.func @_gate_up_silu_kernel(%arg0: i32, %arg1: i32, %arg2: i32, %arg3: memref<16x256xbf16, #tpu.memory_space<vmem>>, %arg4: memref<256x256xbf16, #tpu.memory_space<vmem>>, %arg5: memref<256x256xbf16, #tpu.memory_space<vmem>>, %arg6: memref<16x256xbf16, #tpu.memory_space<vmem>>, %arg7: memref<16x256xf32, #tpu.memory_space<vmem>>, %arg8: memref<16x256xf32, #tpu.memory_space<vmem>>) attributes {dimension_semantics = [#tpu.dimension_semantics<parallel>, #tpu.dimension_semantics<parallel>, #tpu.dimension_semantics<arbitrary>], iteration_bounds = array<i64: 1, 3, 1>, scalar_prefetch = 0 : i64, scratch_operands = 2 : i64, tpu.core_type = #tpu.core_type<tc>, window_params = [{transform_indices = @transform_0, window_bounds = array<i64: 16, 256>}, {transform_indices = @transform_1, window_bounds = array<i64: 256, 256>}, {transform_indices = @transform_2, window_bounds = array<i64: 256, 256>}, {transform_indices = @transform_3, window_bounds = array<i64: 16, 256>}]} {
    %c0_i32 = arith.constant 0 : i32
    %0 = arith.cmpi eq, %arg2, %c0_i32 : i32
    %1 = arith.extui %0 : i1 to i32
    %c0_i32_0 = arith.constant 0 : i32
    %2 = arith.cmpi ne, %1, %c0_i32_0 : i32
    scf.if %2 {
      %cst_17 = arith.constant 0.000000e+00 : f32
      %17 = vector.broadcast %cst_17 : f32 to vector<16x256xf32>
      %c0_18 = arith.constant 0 : index
      %c0_19 = arith.constant 0 : index
      %18 = vector.load %arg7[%c0_18, %c0_19] : memref<16x256xf32, #tpu.memory_space<vmem>>, vector<16x256xf32>
      tpu.vector_store %arg7[%c0_18, %c0_19], %17 {strides = array<i32>} : memref<16x256xf32, #tpu.memory_space<vmem>>, vector<16x256xf32>,
      %cst_20 = arith.constant 0.000000e+00 : f32
      %19 = vector.broadcast %cst_20 : f32 to vector<16x256xf32>
      %c0_21 = arith.constant 0 : index
      %c0_22 = arith.constant 0 : index
      %20 = vector.load %arg8[%c0_21, %c0_22] : memref<16x256xf32, #tpu.memory_space<vmem>>, vector<16x256xf32>
      tpu.vector_store %arg8[%c0_21, %c0_22], %19 {strides = array<i32>} : memref<16x256xf32, #tpu.memory_space<vmem>>, vector<16x256xf32>,
    } else {
    }
    %c0 = arith.constant 0 : index
    %c0_1 = arith.constant 0 : index
    %3 = vector.load %arg3[%c0, %c0_1] : memref<16x256xbf16, #tpu.memory_space<vmem>>, vector<16x256xbf16>
    %c0_2 = arith.constant 0 : index
    %c0_3 = arith.constant 0 : index
    %4 = vector.load %arg7[%c0_2, %c0_3] : memref<16x256xf32, #tpu.memory_space<vmem>>, vector<16x256xf32>
    %c0_4 = arith.constant 0 : index
    %c0_5 = arith.constant 0 : index
    %5 = vector.load %arg4[%c0_4, %c0_5] : memref<256x256xbf16, #tpu.memory_space<vmem>>, vector<256x256xbf16>
    %cst = arith.constant dense<0.000000e+00> : vector<16x256xf32>
    %6 = tpu.matmul %3, %5, %cst {dimension_numbers = #tpu.dot_dimension_numbers<[1], [0], [0], [1], [0, 0, 1, 1], [], []>} : vector<16x256xbf16>, vector<256x256xbf16>, vector<16x256xf32> -> vector<16x256xf32>
    %7 = arith.addf %4, %6 : vector<16x256xf32>
    %c0_6 = arith.constant 0 : index
    %c0_7 = arith.constant 0 : index
    %8 = vector.load %arg7[%c0_6, %c0_7] : memref<16x256xf32, #tpu.memory_space<vmem>>, vector<16x256xf32>
    tpu.vector_store %arg7[%c0_6, %c0_7], %7 {strides = array<i32>} : memref<16x256xf32, #tpu.memory_space<vmem>>, vector<16x256xf32>,
    %c0_8 = arith.constant 0 : index
    %c0_9 = arith.constant 0 : index
    %9 = vector.load %arg8[%c0_8, %c0_9] : memref<16x256xf32, #tpu.memory_space<vmem>>, vector<16x256xf32>
    %c0_10 = arith.constant 0 : index
    %c0_11 = arith.constant 0 : index
    %10 = vector.load %arg5[%c0_10, %c0_11] : memref<256x256xbf16, #tpu.memory_space<vmem>>, vector<256x256xbf16>
    %cst_12 = arith.constant dense<0.000000e+00> : vector<16x256xf32>
    %11 = tpu.matmul %3, %10, %cst_12 {dimension_numbers = #tpu.dot_dimension_numbers<[1], [0], [0], [1], [0, 0, 1, 1], [], []>} : vector<16x256xbf16>, vector<256x256xbf16>, vector<16x256xf32> -> vector<16x256xf32>
    %12 = arith.addf %9, %11 : vector<16x256xf32>
    %c0_13 = arith.constant 0 : index
    %c0_14 = arith.constant 0 : index
    %13 = vector.load %arg8[%c0_13, %c0_14] : memref<16x256xf32, #tpu.memory_space<vmem>>, vector<16x256xf32>
    tpu.vector_store %arg8[%c0_13, %c0_14], %12 {strides = array<i32>} : memref<16x256xf32, #tpu.memory_space<vmem>>, vector<16x256xf32>,
    %c0_i32_15 = arith.constant 0 : i32
    %14 = arith.cmpi eq, %arg2, %c0_i32_15 : i32
    %15 = arith.extui %14 : i1 to i32
    %c0_i32_16 = arith.constant 0 : i32
    %16 = arith.cmpi ne, %15, %c0_i32_16 : i32
    scf.if %16 {
      %c0_17 = arith.constant 0 : index
      %c0_18 = arith.constant 0 : index
      %17 = vector.load %arg7[%c0_17, %c0_18] : memref<16x256xf32, #tpu.memory_space<vmem>>, vector<16x256xf32>
      %c0_19 = arith.constant 0 : index
      %c0_20 = arith.constant 0 : index
      %18 = vector.load %arg8[%c0_19, %c0_20] : memref<16x256xf32, #tpu.memory_space<vmem>>, vector<16x256xf32>
      %cst_21 = arith.constant 0.000000e+00 : f32
      %19 = vector.broadcast %cst_21 : f32 to vector<16x256xf32>
      %20 = arith.subf %19, %17 : vector<16x256xf32>
      %21 = math.exp %20 : vector<16x256xf32>
      %cst_22 = arith.constant 1.000000e+00 : f32
      %22 = vector.broadcast %cst_22 : f32 to vector<16x256xf32>
      %23 = arith.addf %22, %21 : vector<16x256xf32>
      %cst_23 = arith.constant 1.000000e+00 : f32
      %24 = vector.broadcast %cst_23 : f32 to vector<16x256xf32>
      %25 = arith.divf %24, %23 : vector<16x256xf32>
      %26 = arith.mulf %17, %25 : vector<16x256xf32>
      %27 = arith.mulf %26, %18 : vector<16x256xf32>
      %28 = arith.truncf %27 : vector<16x256xf32> to vector<16x256xbf16>
      %c0_24 = arith.constant 0 : index
      %c0_25 = arith.constant 0 : index
      %29 = vector.load %arg6[%c0_24, %c0_25] : memref<16x256xbf16, #tpu.memory_space<vmem>>, vector<16x256xbf16>
      tpu.vector_store %arg6[%c0_24, %c0_25], %28 {strides = array<i32>} : memref<16x256xbf16, #tpu.memory_space<vmem>>, vector<16x256xbf16>,
    } else {
    }
    return
  }
  func.func @transform_0(%arg0: i32, %arg1: i32, %arg2: i32) -> (i32, i32) {
    %c0_i32 = arith.constant 0 : i32
    return %arg0, %arg2 : i32, i32
  }
  func.func @transform_1(%arg0: i32, %arg1: i32, %arg2: i32) -> (i32, i32) {
    %c0_i32 = arith.constant 0 : i32
    return %arg2, %arg1 : i32, i32
  }
  func.func @transform_2(%arg0: i32, %arg1: i32, %arg2: i32) -> (i32, i32) {
    %c0_i32 = arith.constant 0 : i32
    return %arg2, %arg1 : i32, i32
  }
  func.func @transform_3(%arg0: i32, %arg1: i32, %arg2: i32) -> (i32, i32) {
    %c0_i32 = arith.constant 0 : i32
    return %arg0, %arg1 : i32, i32
  }
}

</mosaic_0001>

<llo_original>
// kernel: tpu_custom_call.1
$region0: #{tpu_custom_call.1}
  #allocation0 [shape = 'u32[]', space=smem, size = 0x4, offset = 0x4, fixed_abs, tag = 'smem constant byte address 0x4 - core index']
  #allocation1 [shape = 'u32[144,128]{1,0:T(1,128)}', space=vmem, size = 0x12000, scoped, tag = 'internal scratch']
  #allocation2 [shape = 'f32[16,256]{1,0:T(8,128)}', space=vmem, size = 0x4000, scoped, tag = 'scratch operand']
  #allocation3 [shape = 'f32[16,256]{1,0:T(8,128)}', space=vmem, size = 0x4000, scoped, tag = 'scratch operand']
  %s0 = inlined_call_operand.hbm [shape: bf16[16,256], index: 0, kind: input, shape index: {}]
  %s1 = inlined_call_operand.hbm [shape: bf16[256,768], index: 1, kind: input, shape index: {}]
  %s2 = inlined_call_operand.hbm [shape: bf16[256,768], index: 2, kind: input, shape index: {}]
  %s3 = inlined_call_operand.hbm [shape: bf16[16,768], index: 3, kind: output, shape index: {}]
  %s4 = sld [smem:[#allocation0]]
  $region65: #{tpu_custom_call.1} parent=0
    _
  %s6 = ssub.s32 1, %s4
  %s7 = scalar_select 0, %s6, %s4
  $region1: #{tpu_custom_call.1} parent=0
    #allocation4 [shape = 'u8[8192]{0}', space=vmem, size = 0x2000, scoped, tag = 'input window, operand 0, single buffered']
    #allocation5 [shape = 's32[2]{0}', space=sflag, size = 0x8, scoped, tag = 'scoped memory for tpu_custom_call.1']
    #allocation6 [shape = 's32[2]{0}', space=sflag, size = 0x8, scoped, tag = 'scoped memory for tpu_custom_call.1']
    #allocation7 [shape = 'u8[262144]{0}', space=vmem, size = 0x40000, scoped, tag = 'input window, operand 1']
    #allocation8 [shape = 's32[2]{0}', space=sflag, size = 0x8, scoped, tag = 'scoped memory for tpu_custom_call.1']
    #allocation9 [shape = 'u8[262144]{0}', space=vmem, size = 0x40000, scoped, tag = 'input window, operand 2']
    #allocation10 [shape = 'u8[16384]{0}', space=vmem, size = 0x4000, scoped, tag = 'output window, operand 0']
    %8 = vsyncpa [#allocation5], 0
    %9 = vsyncpa [#allocation8], 0
    %s10 = scalar_lea.sflag [#allocation8], 1
    %11 = vsyncpa %s10, 0
    %12 = vsyncpa [#allocation6], 0
    %s13 = scalar_lea.sflag [#allocation6], 1
    %14 = vsyncpa %s13, 0
    loop: start=0, step=1, limit=5
    $region2: #{tpu_custom_call.1} parent=1 // loop_pre_header
      _
    $region3: #{tpu_custom_call.1} parent=1 // loop_header
      %s16 = sphi 0, %s20
      %p17 = scmp.ge.s32.totalorder %s16, 5
      %s23 = sphi 0, %s42
      %s24 = sphi 0, %s38
      %s25 = sphi 0, %s34
      %s26 = sphi 0, %s23
      %s27 = sphi 0, %s24
      %s28 = sphi 0, %s25
      %s29 = sphi 0, %s26
      %s30 = sphi 0, %s27
      %s31 = sphi 0, %s28
      %s47 = sphi 0, %s49
      %s50 = sphi 0, %s47
      %s51 = sphi 0, %s50
      %s67 = sphi 0, %s51
      %s75 = sphi 0, %s77
      %s78 = sphi 0, %s75
      %s79 = sphi 0, %s78
      %s95 = sphi 0, %s79
      %s103 = sphi 0, %s105
      %s106 = sphi 0, %s103
      %s107 = sphi 0, %s106
      %s123 = sphi 0, %s107
      %s131 = sphi 0, %s133
      %s134 = sphi 0, %s131
      %s135 = sphi 0, %s134
      %s151 = sphi 0, %s135
    $region4: #{tpu_custom_call.1} parent=1 // loop_header_branch
      %19 = sbr.rel (%p17) target = $region8
    $region5: #{tpu_custom_call.1} parent=1 // loop_body
      %s21 = ssub.s32 %s16, 1
      %s22 = ssub.s32 %s16, 2
      %s32 = sadd.s32 1, %s25
      %p33 = scmp.ge.s32.totalorder %s32, 1
      %s34 = scalar_select %p33, 0, %s32
      %s35 = sadd.s32 1, %s24
      %s36 = scalar_select %p33, %s35, %s24
      %p37 = scmp.ge.s32.totalorder %s36, 3
      %s38 = scalar_select %p37, 0, %s36
      %s39 = sadd.s32 1, %s23
      %s40 = scalar_select %p37, %s39, %s23
      %p41 = scmp.ge.s32.totalorder %s40, 1
      %s42 = scalar_select %p41, 0, %s40
      %s43 = ssub.s32 %s23, %s42
      %s44 = ssub.s32 %s25, %s34
      %s45 = sor.u32 %s43, %s44
      %p46 = scmp.eq.s32.totalorder %s45, 0
      %s48 = sadd.s32 %s47, 1
      %s49 = scalar_select %p46, %s47, %s48
      %p52 = pneg %p46
      %p53 = scmp.eq.s32.totalorder %s16, 2
      %p54 = por %p52, %p53
      %p55 = scmp.ne.s32.totalorder %s47, %s50
      %p56 = scmp.eq.s32.totalorder %s16, 0
      %p57 = por %p55, %p56
      %p58 = scmp.ne.s32.totalorder %s47, %s50
      %p59 = scmp.eq.s32.totalorder %s21, 2
      %p60 = por %p58, %p59
      %p61 = scmp.ne.s32.totalorder %s50, %s51
      %p62 = scmp.eq.s32.totalorder %s21, 0
      %p63 = por %p61, %p62
      %p64 = scmp.ne.s32.totalorder %s50, %s51
      %p65 = scmp.eq.s32.totalorder %s22, 2
      %p66 = por %p64, %p65
      %p68 = scmp.ne.s32.totalorder %s51, %s67
      %p69 = scmp.eq.s32.totalorder %s22, 0
      %p70 = por %p68, %p69
      %s71 = ssub.s32 %s25, %s34
      %s72 = ssub.s32 %s24, %s38
      %s73 = sor.u32 %s71, %s72
      %p74 = scmp.eq.s32.totalorder %s73, 0
      %s76 = sadd.s32 %s75, 1
      %s77 = scalar_select %p74, %s75, %s76
      %p80 = pneg %p74
      %p81 = scmp.eq.s32.totalorder %s16, 2
      %p82 = por %p80, %p81
      %p83 = scmp.ne.s32.totalorder %s75, %s78
      %p84 = scmp.eq.s32.totalorder %s16, 0
      %p85 = por %p83, %p84
      %p86 = scmp.ne.s32.totalorder %s75, %s78
      %p87 = scmp.eq.s32.totalorder %s21, 2
      %p88 = por %p86, %p87
      %p89 = scmp.ne.s32.totalorder %s78, %s79
      %p90 = scmp.eq.s32.totalorder %s21, 0
      %p91 = por %p89, %p90
      %p92 = scmp.ne.s32.totalorder %s78, %s79
      %p93 = scmp.eq.s32.totalorder %s22, 2
      %p94 = por %p92, %p93
      %p96 = scmp.ne.s32.totalorder %s79, %s95
      %p97 = scmp.eq.s32.totalorder %s22, 0
      %p98 = por %p96, %p97
      %s99 = ssub.s32 %s25, %s34
      %s100 = ssub.s32 %s24, %s38
      %s101 = sor.u32 %s99, %s100
      %p102 = scmp.eq.s32.totalorder %s101, 0
      %s104 = sadd.s32 %s103, 1
      %s105 = scalar_select %p102, %s103, %s104
      %p108 = pneg %p102
      %p109 = scmp.eq.s32.totalorder %s16, 2
      %p110 = por %p108, %p109
      %p111 = scmp.ne.s32.totalorder %s103, %s106
      %p112 = scmp.eq.s32.totalorder %s16, 0
      %p113 = por %p111, %p112
      %p114 = scmp.ne.s32.totalorder %s103, %s106
      %p115 = scmp.eq.s32.totalorder %s21, 2
      %p116 = por %p114, %p115
      %p117 = scmp.ne.s32.totalorder %s106, %s107
      %p118 = scmp.eq.s32.totalorder %s21, 0
      %p119 = por %p117, %p118
      %p120 = scmp.ne.s32.totalorder %s106, %s107
      %p121 = scmp.eq.s32.totalorder %s22, 2
      %p122 = por %p120, %p121
      %p124 = scmp.ne.s32.totalorder %s107, %s123
      %p125 = scmp.eq.s32.totalorder %s22, 0
      %p126 = por %p124, %p125
      %s127 = ssub.s32 %s23, %s42
      %s128 = ssub.s32 %s24, %s38
      %s129 = sor.u32 %s127, %s128
      %p130 = scmp.eq.s32.totalorder %s129, 0
      %s132 = sadd.s32 %s131, 1
      %s133 = scalar_select %p130, %s131, %s132
      %p136 = pneg %p130
      %p137 = scmp.eq.s32.totalorder %s16, 2
      %p138 = por %p136, %p137
      %p139 = scmp.ne.s32.totalorder %s131, %s134
      %p140 = scmp.eq.s32.totalorder %s16, 0
      %p141 = por %p139, %p140
      %p142 = scmp.ne.s32.totalorder %s131, %s134
      %p143 = scmp.eq.s32.totalorder %s21, 2
      %p144 = por %p142, %p143
      %p145 = scmp.ne.s32.totalorder %s134, %s135
      %p146 = scmp.eq.s32.totalorder %s21, 0
      %p147 = por %p145, %p146
      %p148 = scmp.ne.s32.totalorder %s134, %s135
      %p149 = scmp.eq.s32.totalorder %s22, 2
      %p150 = por %p148, %p149
      %p152 = scmp.ne.s32.totalorder %s135, %s151
      %p153 = scmp.eq.s32.totalorder %s22, 0
      %p154 = por %p152, %p153
      %p155 = scmp.le.s32.totalorder 1, %s16
      %p156 = scmp.lt.s32.totalorder %s16, 4
      %p157 = pnand %p155, %p156
      %p158 = pneg %p157
      // Predicated region
      $region9: #{tpu_custom_call.1} parent=5 // pred_check
        _
      $region10: #{tpu_custom_call.1} parent=5 // pred_check_branch
        %160 = sbr.rel (%p157) target = $region12
      $region11: #{tpu_custom_call.1} parent=5 // pred_region
        %s161 = ssub.s32 %s16, 1
        // Predicated region
        $region13: #{tpu_custom_call.1} parent=11 // pred_check
          %p162 = pneg %p63
        $region14: #{tpu_custom_call.1} parent=11 // pred_check_branch
          %164 = sbr.rel (%p162) target = $region16
        $region15: #{tpu_custom_call.1} parent=11 // pred_region
          %s165 = smul.u32 2, %s26
          %s166 = smul.u32 2, %s28
          %s168 = ssub.s32 256, 256
          %169 = vsyncadd [#allocation5], %s168
          %s170 = smul.addr %s165, 2
          %s171 = sadd.s32 %s166, %s170
          %s172 = smul.addr %s171, 64
          %s173 = scalar_lea.hbm %s0, %s172
          %s174 = sshll.u32 [#allocation4], 4
          %s175 = int_to_ptr.vmem [resolvable:$true] %s174
          %180 = dma.hbm_to_vmem [thread:$0]  %s173, 256, %s175, [#allocation5], 128, 128, 8
        $region16: #{tpu_custom_call.1} parent=11 // pred_fallthru
          _
      $region12: #{tpu_custom_call.1} parent=5 // pred_fallthru
        _
      %p181 = scmp.lt.s32.totalorder %s16, 3
      // Predicated region
      $region17: #{tpu_custom_call.1} parent=5 // pred_check
        %p182 = pneg %p181
      $region18: #{tpu_custom_call.1} parent=5 // pred_check_branch
        %184 = sbr.rel (%p182) target = $region20
      $region19: #{tpu_custom_call.1} parent=5 // pred_region
        // Predicated region
        $region21: #{tpu_custom_call.1} parent=19 // pred_check
          %p185 = pneg %p85
        $region22: #{tpu_custom_call.1} parent=19 // pred_check_branch
          %187 = sbr.rel (%p185) target = $region24
        $region23: #{tpu_custom_call.1} parent=19 // pred_region
          %s188 = sand.u32 %s16, 1
          %s189 = scalar_lea.sflag [#allocation8], %s188
          %s190 = sand.u32 %s75, 1
          %s191 = smul.addr %s190, 256
          %s192 = scalar_lea.vmem [#allocation7], %s191
          %s193 = smul.u32 32, %s25
          %s194 = smul.u32 2, %s24
          %s196 = ssub.s32 4096, 4096
          %197 = vsyncadd %s189, %s196
          %s198 = smul.addr %s193, 6
          %s199 = sadd.s32 %s194, %s198
          %s200 = smul.addr %s199, 64
          %s201 = scalar_lea.hbm %s1, %s200
          %s202 = sshll.u32 %s192, 4
          %s203 = int_to_ptr.vmem [resolvable:$true] %s202
          %208 = dma.hbm_to_vmem [thread:$0]  %s201, 4096, %s203, %s189, 384, 128, 8
        $region24: #{tpu_custom_call.1} parent=19 // pred_fallthru
          _
        // Predicated region
        $region25: #{tpu_custom_call.1} parent=19 // pred_check
          %p209 = pneg %p113
        $region26: #{tpu_custom_call.1} parent=19 // pred_check_branch
          %211 = sbr.rel (%p209) target = $region28
        $region27: #{tpu_custom_call.1} parent=19 // pred_region
          %s212 = sand.u32 %s16, 1
          %s213 = scalar_lea.sflag [#allocation8], %s212
          %s214 = sand.u32 %s103, 1
          %s215 = smul.addr %s214, 256
          %s216 = scalar_lea.vmem [#allocation9], %s215
          %s217 = smul.u32 32, %s25
          %s218 = smul.u32 2, %s24
          %s220 = ssub.s32 4096, 4096
          %221 = vsyncadd %s213, %s220
          %s222 = smul.addr %s217, 6
          %s223 = sadd.s32 %s218, %s222
          %s224 = smul.addr %s223, 64
          %s225 = scalar_lea.hbm %s2, %s224
          %s226 = sshll.u32 %s216, 4
          %s227 = int_to_ptr.vmem [resolvable:$true] %s226
          %232 = dma.hbm_to_vmem [thread:$0]  %s225, 4096, %s227, %s213, 384, 128, 8
        $region28: #{tpu_custom_call.1} parent=19 // pred_fallthru
          _
      $region20: #{tpu_custom_call.1} parent=5 // pred_fallthru
        _
      %p233 = scmp.le.s32.totalorder 1, %s16
      %p234 = scmp.lt.s32.totalorder %s16, 4
      %p235 = pnand %p233, %p234
      %p236 = pneg %p235
      // Predicated region
      $region29: #{tpu_custom_call.1} parent=5 // pred_check
        _
      $region30: #{tpu_custom_call.1} parent=5 // pred_check_branch
        %238 = sbr.rel (%p235) target = $region32
      $region31: #{tpu_custom_call.1} parent=5 // pred_region
        %s239 = ssub.s32 %s16, 1
        // Predicated region
        $region33: #{tpu_custom_call.1} parent=31 // pred_check
          %p240 = pneg %p63
        $region34: #{tpu_custom_call.1} parent=31 // pred_check_branch
          %242 = sbr.rel (%p240) target = $region36
        $region35: #{tpu_custom_call.1} parent=31 // pred_region
          %243 = dma.done [#allocation5], 256
        $region36: #{tpu_custom_call.1} parent=31 // pred_fallthru
          _
        %s244 = sand.u32 %s21, 1
        %s245 = scalar_lea.sflag [#allocation8], %s244
        %s246 = sand.u32 %s78, 1
        %s247 = smul.addr %s246, 256
        %s248 = scalar_lea.vmem [#allocation7], %s247
        // Predicated region
        $region37: #{tpu_custom_call.1} parent=31 // pred_check
          %p249 = pneg %p91
        $region38: #{tpu_custom_call.1} parent=31 // pred_check_branch
          %251 = sbr.rel (%p249) target = $region40
        $region39: #{tpu_custom_call.1} parent=31 // pred_region
          %252 = dma.done %s245, 4096
        $region40: #{tpu_custom_call.1} parent=31 // pred_fallthru
          _
        %s253 = sand.u32 %s21, 1
        %s254 = scalar_lea.sflag [#allocation8], %s253
        %s255 = sand.u32 %s106, 1
        %s256 = smul.addr %s255, 256
        %s257 = scalar_lea.vmem [#allocation9], %s256
        // Predicated region
        $region41: #{tpu_custom_call.1} parent=31 // pred_check
          %p258 = pneg %p119
        $region42: #{tpu_custom_call.1} parent=31 // pred_check_branch
          %260 = sbr.rel (%p258) target = $region44
        $region43: #{tpu_custom_call.1} parent=31 // pred_region
          %261 = dma.done %s254, 4096
        $region44: #{tpu_custom_call.1} parent=31 // pred_fallthru
          _
        %p262 = pneg %p63
        %p263 = pneg %p60
        %s264 = sand.u32 %s21, 1
        %s265 = scalar_lea.sflag [#allocation8], %s264
        %s266 = sand.u32 %s78, 1
        %s267 = smul.addr %s266, 256
        %s268 = scalar_lea.vmem [#allocation7], %s267
        %p269 = pneg %p91
        %p270 = pneg %p88
        %s271 = sand.u32 %s21, 1
        %s272 = scalar_lea.sflag [#allocation8], %s271
        %s273 = sand.u32 %s106, 1
        %s274 = smul.addr %s273, 256
        %s275 = scalar_lea.vmem [#allocation9], %s274
        %p276 = pneg %p119
        %p277 = pneg %p116
        %p278 = pneg %p147
        %p279 = pneg %p144
        %s280 = sand.u32 %s134, 1
        %s281 = scalar_lea.sflag [#allocation6], %s280
        %s282 = sand.u32 %s134, 1
        %s283 = smul.addr %s282, 16
        %s284 = scalar_lea.vmem [#allocation10], %s283
        %s285 = smul.u32 2, %s26
        %s286 = smul.u32 2, %s28
        %s287 = smul.u32 32, %s28
        %s288 = smul.u32 2, %s27
        %s289 = smul.u32 32, %s28
        %s290 = smul.u32 2, %s27
        %s291 = smul.u32 2, %s26
        %s292 = smul.u32 2, %s27
        %p293 = scmp.eq.s32.totalorder %s28, 0
        // Predicated region
        $region45: #{tpu_custom_call.1} parent=31 // pred_check
          %p294 = pneg %p293
        $region46: #{tpu_custom_call.1} parent=31 // pred_check_branch
          %296 = sbr.rel (%p294) target = $region48
        $region47: #{tpu_custom_call.1} parent=31 // pred_region
          %297 = vst [vmem:[#allocation2] sm:$0xff] 0.0
          %298 = vst [vmem:[#allocation2 + $0x8] sm:$0xff] 0.0
          %299 = vst [vmem:[#allocation2 + $0x10] sm:$0xff] 0.0
          %300 = vst [vmem:[#allocation2 + $0x18] sm:$0xff] 0.0
          %301 = vst [vmem:[#allocation3] sm:$0xff] 0.0
          %302 = vst [vmem:[#allocation3 + $0x8] sm:$0xff] 0.0
          %303 = vst [vmem:[#allocation3 + $0x10] sm:$0xff] 0.0
          %304 = vst [vmem:[#allocation3 + $0x18] sm:$0xff] 0.0
        $region48: #{tpu_custom_call.1} parent=31 // pred_fallthru
          _
        %v305 = vld [vmem:[#allocation4] sm:$0xff]
        %v306 = vld [vmem:[#allocation4 + $0x8] sm:$0xff]
        %v307 = vld [vmem:[#allocation2] sm:$0xff]
        %v308 = vld [vmem:[#allocation2 + $0x8] sm:$0xff]
        %v309 = vld [vmem:[#allocation2 + $0x10] sm:$0xff]
        %v310 = vld [vmem:[#allocation2 + $0x18] sm:$0xff]
        %v311 = vld [vmem:[%s248] sm:$0xff]
        %v312 = vld [vmem:[%s248 + $0x8] sm:$0xff]
        %v313 = vld [vmem:[%s248 + $0x10] sm:$0xff]
        %v314 = vld [vmem:[%s248 + $0x18] sm:$0xff]
        %v315 = vld [vmem:[%s248 + $0x20] sm:$0xff]
        %v316 = vld [vmem:[%s248 + $0x28] sm:$0xff]
        %v317 = vld [vmem:[%s248 + $0x30] sm:$0xff]
        %v318 = vld [vmem:[%s248 + $0x38] sm:$0xff]
        %v319 = vld [vmem:[%s248 + $0x40] sm:$0xff]
        %v320 = vld [vmem:[%s248 + $0x48] sm:$0xff]
        %v321 = vld [vmem:[%s248 + $0x50] sm:$0xff]
        %v322 = vld [vmem:[%s248 + $0x58] sm:$0xff]
        %v323 = vld [vmem:[%s248 + $0x60] sm:$0xff]
        %v324 = vld [vmem:[%s248 + $0x68] sm:$0xff]
        %v325 = vld [vmem:[%s248 + $0x70] sm:$0xff]
        %v326 = vld [vmem:[%s248 + $0x78] sm:$0xff]
        %v327 = vld [vmem:[%s248 + $0x80] sm:$0xff]
        %v328 = vld [vmem:[%s248 + $0x88] sm:$0xff]
        %v329 = vld [vmem:[%s248 + $0x90] sm:$0xff]
        %v330 = vld [vmem:[%s248 + $0x98] sm:$0xff]
        %v331 = vld [vmem:[%s248 + $0xa0] sm:$0xff]
        %v332 = vld [vmem:[%s248 + $0xa8] sm:$0xff]
        %v333 = vld [vmem:[%s248 + $0xb0] sm:$0xff]
        %v334 = vld [vmem:[%s248 + $0xb8] sm:$0xff]
        %v335 = vld [vmem:[%s248 + $0xc0] sm:$0xff]
        %v336 = vld [vmem:[%s248 + $0xc8] sm:$0xff]
        %v337 = vld [vmem:[%s248 + $0xd0] sm:$0xff]
        %v338 = vld [vmem:[%s248 + $0xd8] sm:$0xff]
        %v339 = vld [vmem:[%s248 + $0xe0] sm:$0xff]
        %v340 = vld [vmem:[%s248 + $0xe8] sm:$0xff]
        %v341 = vld [vmem:[%s248 + $0xf0] sm:$0xff]
        %v342 = vld [vmem:[%s248 + $0xf8] sm:$0xff]
        %v345 = vunpack.c.l.b16 %v305
        %v346 = vunpack.c.h.b16 %v305
        %v347 = vunpack.c.l.b16 %v306
        %v348 = vunpack.c.h.b16 %v306
        %v349 = vpack.c.b16 %v347, %v345
        %v350 = vpack.c.b16 %v348, %v346
        %v385 = vunpack.c.l.b16 %v311
        %v386 = vunpack.c.h.b16 %v311
        %v387 = vunpack.c.l.b16 %v312
        %v388 = vunpack.c.h.b16 %v312
        %v389 = vunpack.c.l.b16 %v313
        %v390 = vunpack.c.h.b16 %v313
        %v391 = vunpack.c.l.b16 %v314
        %v392 = vunpack.c.h.b16 %v314
        %v393 = vunpack.c.l.b16 %v315
        %v394 = vunpack.c.h.b16 %v315
        %v395 = vunpack.c.l.b16 %v316
        %v396 = vunpack.c.h.b16 %v316
        %v397 = vunpack.c.l.b16 %v317
        %v398 = vunpack.c.h.b16 %v317
        %v399 = vunpack.c.l.b16 %v318
        %v400 = vunpack.c.h.b16 %v318
        %v401 = vunpack.c.l.b16 %v319
        %v402 = vunpack.c.h.b16 %v319
        %v403 = vunpack.c.l.b16 %v320
        %v404 = vunpack.c.h.b16 %v320
        %v405 = vunpack.c.l.b16 %v321
        %v406 = vunpack.c.h.b16 %v321
        %v407 = vunpack.c.l.b16 %v322
        %v408 = vunpack.c.h.b16 %v322
        %v409 = vunpack.c.l.b16 %v323
        %v410 = vunpack.c.h.b16 %v323
        %v411 = vunpack.c.l.b16 %v324
        %v412 = vunpack.c.h.b16 %v324
        %v413 = vunpack.c.l.b16 %v325
        %v414 = vunpack.c.h.b16 %v325
        %v415 = vunpack.c.l.b16 %v326
        %v416 = vunpack.c.h.b16 %v326
        %v417 = vunpack.c.l.b16 %v327
        %v418 = vunpack.c.h.b16 %v327
        %v419 = vunpack.c.l.b16 %v328
        %v420 = vunpack.c.h.b16 %v328
        %v421 = vunpack.c.l.b16 %v329
        %v422 = vunpack.c.h.b16 %v329
        %v423 = vunpack.c.l.b16 %v330
        %v424 = vunpack.c.h.b16 %v330
        %v425 = vunpack.c.l.b16 %v331
        %v426 = vunpack.c.h.b16 %v331
        %v427 = vunpack.c.l.b16 %v332
        %v428 = vunpack.c.h.b16 %v332
        %v429 = vunpack.c.l.b16 %v333
        %v430 = vunpack.c.h.b16 %v333
        %v431 = vunpack.c.l.b16 %v334
        %v432 = vunpack.c.h.b16 %v334
        %v433 = vunpack.c.l.b16 %v335
        %v434 = vunpack.c.h.b16 %v335
        %v435 = vunpack.c.l.b16 %v336
        %v436 = vunpack.c.h.b16 %v336
        %v437 = vunpack.c.l.b16 %v337
        %v438 = vunpack.c.h.b16 %v337
        %v439 = vunpack.c.l.b16 %v338
        %v440 = vunpack.c.h.b16 %v338
        %v441 = vunpack.c.l.b16 %v339
        %v442 = vunpack.c.h.b16 %v339
        %v443 = vunpack.c.l.b16 %v340
        %v444 = vunpack.c.h.b16 %v340
        %v445 = vunpack.c.l.b16 %v341
        %v446 = vunpack.c.h.b16 %v341
        %v447 = vunpack.c.l.b16 %v342
        %v448 = vunpack.c.h.b16 %v342
        %v449 = vpack.c.b16 %v387, %v385
        %v450 = vpack.c.b16 %v388, %v386
        %v451 = vpack.c.b16 %v391, %v389
        %v452 = vpack.c.b16 %v392, %v390
        %v453 = vpack.c.b16 %v395, %v393
        %v454 = vpack.c.b16 %v396, %v394
        %v455 = vpack.c.b16 %v399, %v397
        %v456 = vpack.c.b16 %v400, %v398
        %v457 = vpack.c.b16 %v403, %v401
        %v458 = vpack.c.b16 %v404, %v402
        %v459 = vpack.c.b16 %v407, %v405
        %v460 = vpack.c.b16 %v408, %v406
        %v461 = vpack.c.b16 %v411, %v409
        %v462 = vpack.c.b16 %v412, %v410
        %v463 = vpack.c.b16 %v415, %v413
        %v464 = vpack.c.b16 %v416, %v414
        %v465 = vpack.c.b16 %v419, %v417
        %v466 = vpack.c.b16 %v420, %v418
        %v467 = vpack.c.b16 %v423, %v421
        %v468 = vpack.c.b16 %v424, %v422
        %v469 = vpack.c.b16 %v427, %v425
        %v470 = vpack.c.b16 %v428, %v426
        %v471 = vpack.c.b16 %v431, %v429
        %v472 = vpack.c.b16 %v432, %v430
        %v473 = vpack.c.b16 %v435, %v433
        %v474 = vpack.c.b16 %v436, %v434
        %v475 = vpack.c.b16 %v439, %v437
        %v476 = vpack.c.b16 %v440, %v438
        %v477 = vpack.c.b16 %v443, %v441
        %v478 = vpack.c.b16 %v444, %v442
        %v479 = vpack.c.b16 %v447, %v445
        %v480 = vpack.c.b16 %v448, %v446
        %513 = vmatprep.subr.bf16.mxu0 %v464
        %514 = vmatpush1.bf16.msra.mxu0 %v463
        %515 = vmatprep.subr.bf16.mxu0 %v462
        %516 = vmatpush1.bf16.msra.mxu0 %v461
        %517 = vmatprep.subr.bf16.mxu0 %v460
        %518 = vmatpush1.bf16.msra.mxu0 %v459
        %519 = vmatprep.subr.bf16.mxu0 %v458
        %520 = vmatpush1.bf16.msra.mxu0 %v457
        %521 = vmatprep.subr.bf16.mxu0 %v456
        %522 = vmatpush1.bf16.msra.mxu0 %v455
        %523 = vmatprep.subr.bf16.mxu0 %v454
        %524 = vmatpush1.bf16.msra.mxu0 %v453
        %525 = vmatprep.subr.bf16.mxu0 %v452
        %526 = vmatpush1.bf16.msra.mxu0 %v451
        %527 = vmatprep.subr.bf16.mxu0 %v450
        %528 = vmatpush1.bf16.msra.mxu0 %v449
        %529 = vmatprep.subr.bf16.mxu0 %v480
        %530 = vmatpush2.bf16.msra.mxu0 %v479
        %531 = vmatprep.subr.bf16.mxu0 %v478
        %532 = vmatpush2.bf16.msra.mxu0 %v477
        %533 = vmatprep.subr.bf16.mxu0 %v476
        %534 = vmatpush2.bf16.msra.mxu0 %v475
        %535 = vmatprep.subr.bf16.mxu0 %v474
        %536 = vmatpush2.bf16.msra.mxu0 %v473
        %537 = vmatprep.subr.bf16.mxu0 %v472
        %538 = vmatpush2.bf16.msra.mxu0 %v471
        %539 = vmatprep.subr.bf16.mxu0 %v470
        %540 = vmatpush2.bf16.msra.mxu0 %v469
        %541 = vmatprep.subr.bf16.mxu0 %v468
        %542 = vmatpush2.bf16.msra.mxu0 %v467
        %543 = vmatprep.subr.bf16.mxu0 %v466
        %544 = vmatpush2.bf16.msra.mxu0 %v465
        %545 = vmatprep.mubr.bf16.mxu0 %v350
        %546 = vmatmul.mubr.bf16.gmra.mxu0 %v349
        %v547 = vpop.f32.mrf.mxu0
        %v548 = vadd.f32 0.0, %v547
        %v549 = vpop.f32.mrf.mxu0
        %v550 = vadd.f32 0.0, %v549
        %v551 = vpop.f32.mrf.mxu0
        %v552 = vadd.f32 0.0, %v551
        %v553 = vpop.f32.mrf.mxu0
        %v554 = vadd.f32 0.0, %v553
        %555 = vdwg.mxu0
        %v556 = vadd.f32 %v307, %v548
        %v557 = vadd.f32 %v308, %v550
        %v558 = vadd.f32 %v309, %v552
        %v559 = vadd.f32 %v310, %v554
        %560 = vst [vmem:[#allocation2] sm:$0xff] %v556
        %561 = vst [vmem:[#allocation2 + $0x8] sm:$0xff] %v557
        %562 = vst [vmem:[#allocation2 + $0x10] sm:$0xff] %v558
        %563 = vst [vmem:[#allocation2 + $0x18] sm:$0xff] %v559
        %v564 = vld [vmem:[#allocation3] sm:$0xff]
        %v565 = vld [vmem:[#allocation3 + $0x8] sm:$0xff]
        %v566 = vld [vmem:[#allocation3 + $0x10] sm:$0xff]
        %v567 = vld [vmem:[#allocation3 + $0x18] sm:$0xff]
        %v568 = vld [vmem:[%s257] sm:$0xff]
        %v569 = vld [vmem:[%s257 + $0x8] sm:$0xff]
        %v570 = vld [vmem:[%s257 + $0x10] sm:$0xff]
        %v571 = vld [vmem:[%s257 + $0x18] sm:$0xff]
        %v572 = vld [vmem:[%s257 + $0x20] sm:$0xff]
        %v573 = vld [vmem:[%s257 + $0x28] sm:$0xff]
        %v574 = vld [vmem:[%s257 + $0x30] sm:$0xff]
        %v575 = vld [vmem:[%s257 + $0x38] sm:$0xff]
        %v576 = vld [vmem:[%s257 + $0x40] sm:$0xff]
        %v577 = vld [vmem:[%s257 + $0x48] sm:$0xff]
        %v578 = vld [vmem:[%s257 + $0x50] sm:$0xff]
        %v579 = vld [vmem:[%s257 + $0x58] sm:$0xff]
        %v580 = vld [vmem:[%s257 + $0x60] sm:$0xff]
        %v581 = vld [vmem:[%s257 + $0x68] sm:$0xff]
        %v582 = vld [vmem:[%s257 + $0x70] sm:$0xff]
        %v583 = vld [vmem:[%s257 + $0x78] sm:$0xff]
        %v584 = vld [vmem:[%s257 + $0x80] sm:$0xff]
        %v585 = vld [vmem:[%s257 + $0x88] sm:$0xff]
        %v586 = vld [vmem:[%s257 + $0x90] sm:$0xff]
        %v587 = vld [vmem:[%s257 + $0x98] sm:$0xff]
        %v588 = vld [vmem:[%s257 + $0xa0] sm:$0xff]
        %v589 = vld [vmem:[%s257 + $0xa8] sm:$0xff]
        %v590 = vld [vmem:[%s257 + $0xb0] sm:$0xff]
        %v591 = vld [vmem:[%s257 + $0xb8] sm:$0xff]
        %v592 = vld [vmem:[%s257 + $0xc0] sm:$0xff]
        %v593 = vld [vmem:[%s257 + $0xc8] sm:$0xff]
        %v594 = vld [vmem:[%s257 + $0xd0] sm:$0xff]
        %v595 = vld [vmem:[%s257 + $0xd8] sm:$0xff]
        %v596 = vld [vmem:[%s257 + $0xe0] sm:$0xff]
        %v597 = vld [vmem:[%s257 + $0xe8] sm:$0xff]
        %v598 = vld [vmem:[%s257 + $0xf0] sm:$0xff]
        %v599 = vld [vmem:[%s257 + $0xf8] sm:$0xff]
        %v632 = vunpack.c.l.b16 %v568
        %v633 = vunpack.c.h.b16 %v568
        %v634 = vunpack.c.l.b16 %v569
        %v635 = vunpack.c.h.b16 %v569
        %v636 = vunpack.c.l.b16 %v570
        %v637 = vunpack.c.h.b16 %v570
        %v638 = vunpack.c.l.b16 %v571
        %v639 = vunpack.c.h.b16 %v571
        %v640 = vunpack.c.l.b16 %v572
        %v641 = vunpack.c.h.b16 %v572
        %v642 = vunpack.c.l.b16 %v573
        %v643 = vunpack.c.h.b16 %v573
        %v644 = vunpack.c.l.b16 %v574
        %v645 = vunpack.c.h.b16 %v574
        %v646 = vunpack.c.l.b16 %v575
        %v647 = vunpack.c.h.b16 %v575
        %v648 = vunpack.c.l.b16 %v576
        %v649 = vunpack.c.h.b16 %v576
        %v650 = vunpack.c.l.b16 %v577
        %v651 = vunpack.c.h.b16 %v577
        %v652 = vunpack.c.l.b16 %v578
        %v653 = vunpack.c.h.b16 %v578
        %v654 = vunpack.c.l.b16 %v579
        %v655 = vunpack.c.h.b16 %v579
        %v656 = vunpack.c.l.b16 %v580
        %v657 = vunpack.c.h.b16 %v580
        %v658 = vunpack.c.l.b16 %v581
        %v659 = vunpack.c.h.b16 %v581
        %v660 = vunpack.c.l.b16 %v582
        %v661 = vunpack.c.h.b16 %v582
        %v662 = vunpack.c.l.b16 %v583
        %v663 = vunpack.c.h.b16 %v583
        %v664 = vunpack.c.l.b16 %v584
        %v665 = vunpack.c.h.b16 %v584
        %v666 = vunpack.c.l.b16 %v585
        %v667 = vunpack.c.h.b16 %v585
        %v668 = vunpack.c.l.b16 %v586
        %v669 = vunpack.c.h.b16 %v586
        %v670 = vunpack.c.l.b16 %v587
        %v671 = vunpack.c.h.b16 %v587
        %v672 = vunpack.c.l.b16 %v588
        %v673 = vunpack.c.h.b16 %v588
        %v674 = vunpack.c.l.b16 %v589
        %v675 = vunpack.c.h.b16 %v589
        %v676 = vunpack.c.l.b16 %v590
        %v677 = vunpack.c.h.b16 %v590
        %v678 = vunpack.c.l.b16 %v591
        %v679 = vunpack.c.h.b16 %v591
        %v680 = vunpack.c.l.b16 %v592
        %v681 = vunpack.c.h.b16 %v592
        %v682 = vunpack.c.l.b16 %v593
        %v683 = vunpack.c.h.b16 %v593
        %v684 = vunpack.c.l.b16 %v594
        %v685 = vunpack.c.h.b16 %v594
        %v686 = vunpack.c.l.b16 %v595
        %v687 = vunpack.c.h.b16 %v595
        %v688 = vunpack.c.l.b16 %v596
        %v689 = vunpack.c.h.b16 %v596
        %v690 = vunpack.c.l.b16 %v597
        %v691 = vunpack.c.h.b16 %v597
        %v692 = vunpack.c.l.b16 %v598
        %v693 = vunpack.c.h.b16 %v598
        %v694 = vunpack.c.l.b16 %v599
        %v695 = vunpack.c.h.b16 %v599
        %v696 = vpack.c.b16 %v634, %v632
        %v697 = vpack.c.b16 %v635, %v633
        %v698 = vpack.c.b16 %v638, %v636
        %v699 = vpack.c.b16 %v639, %v637
        %v700 = vpack.c.b16 %v642, %v640
        %v701 = vpack.c.b16 %v643, %v641
        %v702 = vpack.c.b16 %v646, %v644
        %v703 = vpack.c.b16 %v647, %v645
        %v704 = vpack.c.b16 %v650, %v648
        %v705 = vpack.c.b16 %v651, %v649
        %v706 = vpack.c.b16 %v654, %v652
        %v707 = vpack.c.b16 %v655, %v653
        %v708 = vpack.c.b16 %v658, %v656
        %v709 = vpack.c.b16 %v659, %v657
        %v710 = vpack.c.b16 %v662, %v660
        %v711 = vpack.c.b16 %v663, %v661
        %v712 = vpack.c.b16 %v666, %v664
        %v713 = vpack.c.b16 %v667, %v665
        %v714 = vpack.c.b16 %v670, %v668
        %v715 = vpack.c.b16 %v671, %v669
        %v716 = vpack.c.b16 %v674, %v672
        %v717 = vpack.c.b16 %v675, %v673
        %v718 = vpack.c.b16 %v678, %v676
        %v719 = vpack.c.b16 %v679, %v677
        %v720 = vpack.c.b16 %v682, %v680
        %v721 = vpack.c.b16 %v683, %v681
        %v722 = vpack.c.b16 %v686, %v684
        %v723 = vpack.c.b16 %v687, %v685
        %v724 = vpack.c.b16 %v690, %v688
        %v725 = vpack.c.b16 %v691, %v689
        %v726 = vpack.c.b16 %v694, %v692
        %v727 = vpack.c.b16 %v695, %v693
        %760 = vmatprep.subr.bf16.mxu0 %v711
        %761 = vmatpush1.bf16.msra.mxu0 %v710
        %762 = vmatprep.subr.bf16.mxu0 %v709
        %763 = vmatpush1.bf16.msra.mxu0 %v708
        %764 = vmatprep.subr.bf16.mxu0 %v707
        %765 = vmatpush1.bf16.msra.mxu0 %v706
        %766 = vmatprep.subr.bf16.mxu0 %v705
        %767 = vmatpush1.bf16.msra.mxu0 %v704
        %768 = vmatprep.subr.bf16.mxu0 %v703
        %769 = vmatpush1.bf16.msra.mxu0 %v702
        %770 = vmatprep.subr.bf16.mxu0 %v701
        %771 = vmatpush1.bf16.msra.mxu0 %v700
        %772 = vmatprep.subr.bf16.mxu0 %v699
        %773 = vmatpush1.bf16.msra.mxu0 %v698
        %774 = vmatprep.subr.bf16.mxu0 %v697
        %775 = vmatpush1.bf16.msra.mxu0 %v696
        %776 = vmatprep.subr.bf16.mxu0 %v727
        %777 = vmatpush2.bf16.msra.mxu0 %v726
        %778 = vmatprep.subr.bf16.mxu0 %v725
        %779 = vmatpush2.bf16.msra.mxu0 %v724
        %780 = vmatprep.subr.bf16.mxu0 %v723
        %781 = vmatpush2.bf16.msra.mxu0 %v722
        %782 = vmatprep.subr.bf16.mxu0 %v721
        %783 = vmatpush2.bf16.msra.mxu0 %v720
        %784 = vmatprep.subr.bf16.mxu0 %v719
        %785 = vmatpush2.bf16.msra.mxu0 %v718
        %786 = vmatprep.subr.bf16.mxu0 %v717
        %787 = vmatpush2.bf16.msra.mxu0 %v716
        %788 = vmatprep.subr.bf16.mxu0 %v715
        %789 = vmatpush2.bf16.msra.mxu0 %v714
        %790 = vmatprep.subr.bf16.mxu0 %v713
        %791 = vmatpush2.bf16.msra.mxu0 %v712
        %792 = vmatprep.mubr.bf16.mxu0 %v350
        %793 = vmatmul.mubr.bf16.gmra.mxu0 %v349
        %v794 = vpop.f32.mrf.mxu0
        %v795 = vadd.f32 0.0, %v794
        %v796 = vpop.f32.mrf.mxu0
        %v797 = vadd.f32 0.0, %v796
        %v798 = vpop.f32.mrf.mxu0
        %v799 = vadd.f32 0.0, %v798
        %v800 = vpop.f32.mrf.mxu0
        %v801 = vadd.f32 0.0, %v800
        %802 = vdwg.mxu0
        %v803 = vadd.f32 %v564, %v795
        %v804 = vadd.f32 %v565, %v797
        %v805 = vadd.f32 %v566, %v799
        %v806 = vadd.f32 %v567, %v801
        %807 = vst [vmem:[#allocation3] sm:$0xff] %v803
        %808 = vst [vmem:[#allocation3 + $0x8] sm:$0xff] %v804
        %809 = vst [vmem:[#allocation3 + $0x10] sm:$0xff] %v805
        %810 = vst [vmem:[#allocation3 + $0x18] sm:$0xff] %v806
        // Predicated region
        $region49: #{tpu_custom_call.1} parent=31 // pred_check
          %p811 = pneg %p293
        $region50: #{tpu_custom_call.1} parent=31 // pred_check_branch
          %813 = sbr.rel (%p811) target = $region52
        $region51: #{tpu_custom_call.1} parent=31 // pred_region
          %v814 = vld [vmem:[#allocation2] sm:$0xff]
          %v815 = vld [vmem:[#allocation2 + $0x8] sm:$0xff]
          %v816 = vld [vmem:[#allocation2 + $0x10] sm:$0xff]
          %v817 = vld [vmem:[#allocation2 + $0x18] sm:$0xff]
          %v818 = vld [vmem:[#allocation3] sm:$0xff]
          %v819 = vld [vmem:[#allocation3 + $0x8] sm:$0xff]
          %v820 = vld [vmem:[#allocation3 + $0x10] sm:$0xff]
          %v821 = vld [vmem:[#allocation3 + $0x18] sm:$0xff]
          %v822 = vsub.f32 0.0, %v814
          %v823 = vsub.f32 0.0, %v815
          %v824 = vsub.f32 0.0, %v816
          %v825 = vsub.f32 0.0, %v817
          %v826 = vmul.f32 %v822, 1.442695
          %v827 = vpow.pop %v826
          %v828 = vmul.f32 %v823, 1.442695
          %v829 = vpow.pop %v828
          %v830 = vmul.f32 %v824, 1.442695
          %v831 = vpow.pop %v830
          %v832 = vmul.f32 %v825, 1.442695
          %v833 = vpow.pop %v832
          %v834 = vadd.f32 %v827, 1.0
          %v835 = vadd.f32 %v829, 1.0
          %v836 = vadd.f32 %v831, 1.0
          %v837 = vadd.f32 %v833, 1.0
          %v838 = vrcp.pop %v834
          %v839 = vmul.f32 1.0, %v838
          %v840 = vrcp.pop %v835
          %v841 = vmul.f32 1.0, %v840
          %v842 = vrcp.pop %v836
          %v843 = vmul.f32 1.0, %v842
          %v844 = vrcp.pop %v837
          %v845 = vmul.f32 1.0, %v844
          %v846 = vmul.f32 %v814, %v839
          %v847 = vmul.f32 %v815, %v841
          %v848 = vmul.f32 %v816, %v843
          %v849 = vmul.f32 %v817, %v845
          %v850 = vmul.f32 %v846, %v818
          %v851 = vmul.f32 %v847, %v819
          %v852 = vmul.f32 %v848, %v820
          %v853 = vmul.f32 %v849, %v821
          %v854 = vpack.c.bf16 %v852, %v850
          %v855 = vpack.c.bf16 %v853, %v851
          %v858 = vunpack.c.l.b16 %v854
          %v859 = vunpack.c.l.b16 %v855
          %v860 = vunpack.c.h.b16 %v854
          %v861 = vunpack.c.h.b16 %v855
          %v862 = vpack.c.b16 %v859, %v858
          %v863 = vpack.c.b16 %v861, %v860
          %866 = vst [vmem:[%s284] sm:$0xff] %v862
          %867 = vst [vmem:[%s284 + $0x8] sm:$0xff] %v863
        $region52: #{tpu_custom_call.1} parent=31 // pred_fallthru
          _
        %s868 = sand.u32 %s134, 1
        %s869 = scalar_lea.sflag [#allocation6], %s868
        %s870 = sand.u32 %s134, 1
        %s871 = smul.addr %s870, 16
        %s872 = scalar_lea.vmem [#allocation10], %s871
        // Predicated region
        $region53: #{tpu_custom_call.1} parent=31 // pred_check
          %p873 = pneg %p144
        $region54: #{tpu_custom_call.1} parent=31 // pred_check_branch
          %875 = sbr.rel (%p873) target = $region56
        $region55: #{tpu_custom_call.1} parent=31 // pred_region
          %s876 = smul.u32 2, %s26
          %s877 = smul.u32 2, %s27
          %s879 = ssub.s32 256, 256
          %880 = vsyncadd %s869, %s879
          %s881 = smul.addr %s876, 6
          %s882 = sadd.s32 %s877, %s881
          %s883 = smul.addr %s882, 64
          %s884 = scalar_lea.hbm %s3, %s883
          %s885 = sshll.u32 %s872, 4
          %s886 = int_to_ptr.vmem [resolvable:$true] %s885
          %891 = dma.vmem_to_hbm [thread:$0]  %s886, 256, %s884, %s869, 128, 384, 8
        $region56: #{tpu_custom_call.1} parent=31 // pred_fallthru
          _
      $region32: #{tpu_custom_call.1} parent=5 // pred_fallthru
        _
      %p892 = scmp.le.s32.totalorder 2, %s16
      // Predicated region
      $region57: #{tpu_custom_call.1} parent=5 // pred_check
        %p893 = pneg %p892
      $region58: #{tpu_custom_call.1} parent=5 // pred_check_branch
        %895 = sbr.rel (%p893) target = $region60
      $region59: #{tpu_custom_call.1} parent=5 // pred_region
        %s896 = ssub.s32 %s16, 2
        // Predicated region
        $region61: #{tpu_custom_call.1} parent=59 // pred_check
          %p897 = pneg %p150
        $region62: #{tpu_custom_call.1} parent=59 // pred_check_branch
          %899 = sbr.rel (%p897) target = $region64
        $region63: #{tpu_custom_call.1} parent=59 // pred_region
          %s900 = sand.u32 %s135, 1
          %s901 = scalar_lea.sflag [#allocation6], %s900
          %s902 = sand.u32 %s135, 1
          %s903 = smul.addr %s902, 16
          %s904 = scalar_lea.vmem [#allocation10], %s903
          %905 = dma.done %s901, 256
        $region64: #{tpu_custom_call.1} parent=59 // pred_fallthru
          _
      $region60: #{tpu_custom_call.1} parent=5 // pred_fallthru
        _
    $region6: #{tpu_custom_call.1} parent=1 // loop_footer
      %s20 = sadd.s32 1, %s16
    $region7: #{tpu_custom_call.1} parent=1 // loop_footer_branch
      %15 = sbr.rel target = $region3
    $region8: #{tpu_custom_call.1} parent=1 // loop_exit
      _
    %906 = vsyncpa [#allocation5], 1
    %s907 = scalar_lea.sflag [#allocation5], 1
    %908 = vsyncpa %s907, 1
    %909 = vsyncpa [#allocation8], 1
    %s910 = scalar_lea.sflag [#allocation8], 1
    %911 = vsyncpa %s910, 1
    %912 = vsyncpa [#allocation6], 1
    %s913 = scalar_lea.sflag [#allocation6], 1
    %914 = vsyncpa %s913, 1

</llo_original>
